<compile_context>
chip_gen: v7x
topology: tpu7x:2x2x1
jax: 0.10.0
libtpu: 0.0.40
codegen_flags: <defaults>
</compile_context>

<pallas_src>
import math

import jax
import jax.numpy as jnp
from jax.experimental import pallas as pl
from jax.experimental.pallas import tpu as pltpu

BN_EPS = 1e-5
LEAKY_SLOPE = 0.1          # matches nn.LeakyReLU(0.1)
TWO_PI = 2.0 * math.pi

LANE = 128                 # last-dim (lane) alignment for the hidden dim
SUBLANE = 8                # second-to-last-dim (sublane) alignment
MAX_TILE_B = 4096          # VMEM guard (v7x: 64 MiB phys / 32 MiB scoped default)


def _round_up(v, m):
    return (v + m - 1) // m * m


def _cdiv(a, b):
    return -(-a // b)


# ---------------------------------------------------------------------------
# Kernel: two MXU matmuls + VPU leaky-relu + EUP sigmoid. BN (eval) and
# Dropout (eval = identity) are folded into w3/b3 on the host.
# ---------------------------------------------------------------------------
def network1_kernel(x_ref, w1_ref, b1_ref, w3_ref, b3_ref, o_ref):
    # linear_1 + bias, LeakyReLU(0.1)  (f32 accumulation regardless of input dtype)
    h = jnp.dot(x_ref[...], w1_ref[...], preferred_element_type=jnp.float32)
    h = h + b1_ref[...]
    h = jnp.where(h > 0, h, LEAKY_SLOPE * h)
    # BN folded into w3/b3; dropout is identity in eval mode.
    h = h.astype(w3_ref.dtype)
    y = jnp.dot(h, w3_ref[...], preferred_element_type=jnp.float32) + b3_ref[...]
    o_ref[...] = (jax.nn.sigmoid(y) * TWO_PI).astype(o_ref.dtype)


# ---------------------------------------------------------------------------
# Host-side one-time param prep: fold BN into linear_3, pad hidden dim to 128
# lanes (exact no-op math), optionally cast weights to bf16. Biases stay f32.
# ---------------------------------------------------------------------------
def prepare_params(params, weight_dtype=jnp.float32):
    w1, b1 = params["w1"], params["b1"]            # (in, n), (n,)
    w3, b3 = params["w3"], params["b3"]            # (n, out), (out,)

    inv_std = jax.lax.rsqrt(params["bn_rvar"] + BN_EPS)       # (n,)
    scale = params["bn_gamma"] * inv_std                      # (n,)
    shift = params["bn_beta"] - params["bn_rmean"] * scale    # (n,)
    w3f = scale[:, None] * w3                                 # (n, out)
    b3f = b3 + shift @ w3                                     # (out,)

    in_size, n = w1.shape
    out_size = w3.shape[1]
    n_p = _round_up(n, LANE)                                  # lane-dense hidden

    w1_p = jnp.zeros((in_size, n_p), jnp.float32).at[:, :n].set(w1)
    b1_p = jnp.zeros((1, n_p), jnp.float32).at[0, :n].set(b1)
    w3_p = jnp.zeros((n_p, out_size), jnp.float32).at[:n, :].set(w3f)
    b3_p = b3f.reshape(1, out_size).astype(jnp.float32)

    return {
        "w1": w1_p.astype(weight_dtype),
        "b1": b1_p,                      # bias added post-MXU in f32
        "w3": w3_p.astype(weight_dtype),
        "b3": b3_p,
        "in_size": in_size,
        "out_size": out_size,
    }


# ---------------------------------------------------------------------------
# Wrapper: batch-tiled 1-D grid over x as-is (no pad/copy, no output slice).
# ---------------------------------------------------------------------------
def network1_forward(x, prepped, *, tile_b=1024, x_dtype=None):
    w1, b1, w3, b3 = prepped["w1"], prepped["b1"], prepped["w3"], prepped["b3"]
    in_size, out_size = prepped["in_size"], prepped["out_size"]
    assert x.shape[1] == in_size
    n_p = w1.shape[1]

    B = x.shape[0]
    if x_dtype is None:
        x_dtype = w1.dtype                       # match weight dtype (bf16 or f32)
    x = x.astype(x_dtype)                        # cast only, no pad/copy of layout

    # --- batch tiling: large tiles (kernel is HBM-bound; ~0.35us per grid step)
    tile_b = max(SUBLANE, _round_up(int(tile_b), SUBLANE))    # Mosaic sublane rule
    tile_b = min(tile_b, MAX_TILE_B)                          # v7x VMEM guard
    tile_b = min(tile_b, _round_up(B, SUBLANE))               # don't overshoot batch
    # Prefer >= 2 grid steps for non-trivial batches so "parallel" can shard
    # across the two v7x TensorCores.
    if _cdiv(B, tile_b) == 1 and B >= 512:
        tile_b = _round_up(_cdiv(B, 2), SUBLANE)
    grid = (_cdiv(B, tile_b),)   # ragged last block: reads padded, writes masked

    itemsize = jnp.dtype(x_dtype).itemsize
    flops = 2 * B * (in_size * n_p + n_p * out_size)
    bytes_accessed = (B * in_size * itemsize                 # x read
                      + B * out_size * 4                     # out write
                      + (w1.size + w3.size) * jnp.dtype(w1.dtype).itemsize
                      + (b1.size + b3.size) * 4)

    out = pl.pallas_call(
        network1_kernel,
        out_shape=jax.ShapeDtypeStruct((B, out_size), jnp.float32),
        grid=grid,
        in_specs=[
            pl.BlockSpec((tile_b, in_size), lambda i: (i, 0)),  # x: batch-tiled, full K
            pl.BlockSpec((in_size, n_p), lambda i: (0, 0)),     # w1: VMEM-resident
            pl.BlockSpec((1, n_p), lambda i: (0, 0)),           # b1
            pl.BlockSpec((n_p, out_size), lambda i: (0, 0)),    # w3 (BN folded)
            pl.BlockSpec((1, out_size), lambda i: (0, 0)),      # b3 (BN folded)
        ],
        out_specs=pl.BlockSpec((tile_b, out_size), lambda i: (i, 0)),
        compiler_params=pltpu.CompilerParams(
            dimension_semantics=("parallel",)),                 # megacore on v7x
        cost_estimate=pl.CostEstimate(
            flops=flops,
            transcendentals=B * out_size,                       # sigmoid exp
            bytes_accessed=bytes_accessed),
    )(x, w1, b1, w3, b3)

    return out


# ---------------------------------------------------------------------------
# Deterministic init mimicking nn.Linear defaults; BN with fresh running stats.
# Weights stored pre-transposed as (in_features, out_features).
# ---------------------------------------------------------------------------
def init_params(key, input_size, n, output_size):
    ks = jax.random.split(key, 6)

    def lin(kw, kb, fan_in, fan_out):
        bound = 1.0 / math.sqrt(fan_in)
        w = jax.random.uniform(kw, (fan_in, fan_out), jnp.float32, -bound, bound)
        b = jax.random.uniform(kb, (fan_out,), jnp.float32, -bound, bound)
        return w, b

    w1, b1 = lin(ks[0], ks[1], input_size, n)
    _w2, _b2 = lin(ks[2], ks[3], n, n)    # linear_2 exists but is unused in forward()
    w3, b3 = lin(ks[4], ks[5], n, output_size)

    return {
        "w1": w1, "b1": b1,
        "w3": w3, "b3": b3,
        "bn_gamma": jnp.ones((n,), jnp.float32),
        "bn_beta": jnp.zeros((n,), jnp.float32),
        "bn_rmean": jnp.zeros((n,), jnp.float32),
        "bn_rvar": jnp.ones((n,), jnp.float32),
    }


def reference_forward(x, params):
    """Pure-JAX reference matching network_1.forward in eval mode."""
    h = x @ params["w1"] + params["b1"]
    h = jnp.where(h > 0, h, LEAKY_SLOPE * h)
    inv_std = jax.lax.rsqrt(params["bn_rvar"] + BN_EPS)
    h = (h - params["bn_rmean"]) * inv_std * params["bn_gamma"] + params["bn_beta"]
    # dropout: identity in eval mode
    y = h @ params["w3"] + params["b3"]
    return jax.nn.sigmoid(y) * TWO_PI


if __name__ == "__main__":
    input_size, n, output_size = 16, 32, 8
    batch = 8

    key = jax.random.PRNGKey(0)
    kx, kp = jax.random.split(key)
    x = jax.random.normal(kx, (batch, input_size), jnp.float32)

    raw_params = init_params(kp, input_size, n, output_size)
    ref = reference_forward(x, raw_params)

    # f32 path: tight correctness check.
    prepped_f32 = prepare_params(raw_params, weight_dtype=jnp.float32)
    out_f32 = jax.block_until_ready(network1_forward(x, prepped_f32))
    assert out_f32.shape == (batch, output_size)
    assert jnp.allclose(out_f32, ref, atol=1e-5, rtol=1e-5), "f32 mismatch vs reference"

    # bf16 input/weight path (halves HBM bytes on dominant tensors; f32 accum).
    prepped_bf16 = prepare_params(raw_params, weight_dtype=jnp.bfloat16)
    out_bf16 = jax.block_until_ready(network1_forward(x, prepped_bf16))
    assert out_bf16.shape == (batch, output_size)
    assert jnp.allclose(out_bf16, ref, atol=7e-2, rtol=5e-2), "bf16 mismatch vs reference"

    print("KERNEL_OK")
</pallas_src>

<mosaic_0001>
module attributes {stable_mosaic.version = 11 : i64} {
  func.func @network1_kernel(%arg0: i32, %arg1: memref<8x16xf32, #tpu.memory_space<vmem>>, %arg2: memref<16x128xf32, #tpu.memory_space<vmem>>, %arg3: memref<1x128xf32, #tpu.memory_space<vmem>>, %arg4: memref<128x8xf32, #tpu.memory_space<vmem>>, %arg5: memref<1x8xf32, #tpu.memory_space<vmem>>, %arg6: memref<8x8xf32, #tpu.memory_space<vmem>>) attributes {dimension_semantics = [#tpu.dimension_semantics<parallel>], iteration_bounds = array<i64: 1>, scalar_prefetch = 0 : i64, scratch_operands = 0 : i64, tpu.core_type = #tpu.core_type<tc>, window_params = [{transform_indices = @transform_0, window_bounds = array<i64: 8, 16>}, {pipeline_mode = #tpu.pipeline_mode<synchronous>, transform_indices = @transform_1, window_bounds = array<i64: 16, 128>}, {pipeline_mode = #tpu.pipeline_mode<synchronous>, transform_indices = @transform_2, window_bounds = array<i64: 1, 128>}, {pipeline_mode = #tpu.pipeline_mode<synchronous>, transform_indices = @transform_3, window_bounds = array<i64: 128, 8>}, {pipeline_mode = #tpu.pipeline_mode<synchronous>, transform_indices = @transform_4, window_bounds = array<i64: 1, 8>}, {transform_indices = @transform_5, window_bounds = array<i64: 8, 8>}]} {
    %c0 = arith.constant 0 : index
    %c0_0 = arith.constant 0 : index
    %0 = vector.load %arg1[%c0, %c0_0] : memref<8x16xf32, #tpu.memory_space<vmem>>, vector<8x16xf32>
    %c0_1 = arith.constant 0 : index
    %c0_2 = arith.constant 0 : index
    %1 = vector.load %arg2[%c0_1, %c0_2] : memref<16x128xf32, #tpu.memory_space<vmem>>, vector<16x128xf32>
    %cst = arith.constant dense<0.000000e+00> : vector<8x128xf32>
    %2 = tpu.matmul %0, %1, %cst {dimension_numbers = #tpu.dot_dimension_numbers<[1], [0], [0], [1], [0, 0, 1, 1], [], []>} : vector<8x16xf32>, vector<16x128xf32>, vector<8x128xf32> -> vector<8x128xf32>
    %c0_3 = arith.constant 0 : index
    %c0_4 = arith.constant 0 : index
    %3 = vector.load %arg3[%c0_3, %c0_4] : memref<1x128xf32, #tpu.memory_space<vmem>>, vector<1x128xf32>
    %4 = vector.broadcast %3 : vector<1x128xf32> to vector<8x128xf32>
    %5 = arith.addf %2, %4 : vector<8x128xf32>
    %cst_5 = arith.constant 0.000000e+00 : f32
    %6 = vector.broadcast %cst_5 : f32 to vector<8x128xf32>
    %7 = arith.cmpf ogt, %5, %6 : vector<8x128xf32>
    %cst_6 = arith.constant 1.000000e-01 : f32
    %8 = vector.broadcast %cst_6 : f32 to vector<8x128xf32>
    %9 = arith.mulf %8, %5 : vector<8x128xf32>
    %10 = arith.select %7, %5, %9 : vector<8x128xi1>, vector<8x128xf32>
    %c0_7 = arith.constant 0 : index
    %c0_8 = arith.constant 0 : index
    %11 = vector.load %arg4[%c0_7, %c0_8] : memref<128x8xf32, #tpu.memory_space<vmem>>, vector<128x8xf32>
    %cst_9 = arith.constant dense<0.000000e+00> : vector<8x8xf32>
    %12 = tpu.matmul %10, %11, %cst_9 {dimension_numbers = #tpu.dot_dimension_numbers<[1], [0], [0], [1], [0, 0, 1, 1], [], []>} : vector<8x128xf32>, vector<128x8xf32>, vector<8x8xf32> -> vector<8x8xf32>
    %c0_10 = arith.constant 0 : index
    %c0_11 = arith.constant 0 : index
    %13 = vector.load %arg5[%c0_10, %c0_11] : memref<1x8xf32, #tpu.memory_space<vmem>>, vector<1x8xf32>
    %14 = vector.broadcast %13 : vector<1x8xf32> to vector<8x8xf32>
    %15 = arith.addf %12, %14 : vector<8x8xf32>
    %16 = arith.negf %15 : vector<8x8xf32>
    %17 = math.exp %16 : vector<8x8xf32>
    %cst_12 = arith.constant 1.000000e+00 : f32
    %18 = vector.broadcast %cst_12 : f32 to vector<8x8xf32>
    %19 = arith.addf %18, %17 : vector<8x8xf32>
    %20 = arith.divf %18, %19 : vector<8x8xf32>
    %cst_13 = arith.constant 6.28318548 : f32
    %21 = vector.broadcast %cst_13 : f32 to vector<8x8xf32>
    %22 = arith.mulf %20, %21 : vector<8x8xf32>
    %c0_14 = arith.constant 0 : index
    %c0_15 = arith.constant 0 : index
    %23 = vector.load %arg6[%c0_14, %c0_15] : memref<8x8xf32, #tpu.memory_space<vmem>>, vector<8x8xf32>
    tpu.vector_store %arg6[%c0_14, %c0_15], %22 {strides = array<i32>} : memref<8x8xf32, #tpu.memory_space<vmem>>, vector<8x8xf32>,
    return
  }
  func.func @transform_0(%arg0: i32) -> (i32, i32) {
    %c0_i32 = arith.constant 0 : i32
    %c0_i32_0 = arith.constant 0 : i32
    return %arg0, %c0_i32 : i32, i32
  }
  func.func @transform_1(%arg0: i32) -> (i32, i32) {
    %c0_i32 = arith.constant 0 : i32
    %c0_i32_0 = arith.constant 0 : i32
    %c0_i32_1 = arith.constant 0 : i32
    return %c0_i32, %c0_i32_0 : i32, i32
  }
  func.func @transform_2(%arg0: i32) -> (i32, i32) {
    %c0_i32 = arith.constant 0 : i32
    %c0_i32_0 = arith.constant 0 : i32
    %c0_i32_1 = arith.constant 0 : i32
    return %c0_i32, %c0_i32_0 : i32, i32
  }
  func.func @transform_3(%arg0: i32) -> (i32, i32) {
    %c0_i32 = arith.constant 0 : i32
    %c0_i32_0 = arith.constant 0 : i32
    %c0_i32_1 = arith.constant 0 : i32
    return %c0_i32, %c0_i32_0 : i32, i32
  }
  func.func @transform_4(%arg0: i32) -> (i32, i32) {
    %c0_i32 = arith.constant 0 : i32
    %c0_i32_0 = arith.constant 0 : i32
    %c0_i32_1 = arith.constant 0 : i32
    return %c0_i32, %c0_i32_0 : i32, i32
  }
  func.func @transform_5(%arg0: i32) -> (i32, i32) {
    %c0_i32 = arith.constant 0 : i32
    %c0_i32_0 = arith.constant 0 : i32
    return %arg0, %c0_i32 : i32, i32
  }
}

</mosaic_0001>

<llo_original>
// kernel: tpu_custom_call.1
$region0: #{tpu_custom_call.1}
  #allocation0 [shape = 'u32[]', space=smem, size = 0x4, offset = 0x4, fixed_abs, tag = 'smem constant byte address 0x4 - core index']
  #allocation1 [shape = 'u32[144,128]{1,0:T(1,128)}', space=vmem, size = 0x12000, scoped, tag = 'internal scratch']
  %s0 = inlined_call_operand.vmem [shape: f32[8,16], index: 0, kind: input, shape index: {}]
  %s1 = inlined_call_operand.vmem [shape: f32[16,128], index: 1, kind: input, shape index: {}]
  %s2 = inlined_call_operand.vmem [shape: f32[1,128], index: 2, kind: input, shape index: {}]
  %s3 = inlined_call_operand.vmem [shape: f32[128,8], index: 3, kind: input, shape index: {}]
  %s4 = inlined_call_operand.vmem [shape: f32[1,8], index: 4, kind: input, shape index: {}]
  %s5 = inlined_call_operand.hbm [shape: f32[8,8], index: 5, kind: output, shape index: {}]
  %s6 = sld [smem:[#allocation0]]
  $region30: #{tpu_custom_call.1} parent=0
    _
  %s8 = ssub.s32 1, %s6
  %s9 = scalar_select 0, %s8, %s6
  $region1: #{tpu_custom_call.1} parent=0
    #allocation2 [shape = 'u8[4096]{0}', space=vmem, size = 0x1000, scoped, tag = 'output window, operand 0, single buffered']
    #allocation3 [shape = 's32[1]{0}', space=sflag, size = 0x4, scoped, tag = 'scoped memory for tpu_custom_call.1']
    %10 = vsyncpa [#allocation3], 0
    // Predicated region
    $region2: #{tpu_custom_call.1} parent=1 // pred_check
      _
    $region3: #{tpu_custom_call.1} parent=1 // pred_check_branch
      %12 = sbr.rel (0) target = $region5
    $region4: #{tpu_custom_call.1} parent=1 // pred_region
      _
    $region5: #{tpu_custom_call.1} parent=1 // pred_fallthru
      _
    // Predicated region
    $region6: #{tpu_custom_call.1} parent=1 // pred_check
      _
    $region7: #{tpu_custom_call.1} parent=1 // pred_check_branch
      %14 = sbr.rel (0) target = $region9
    $region8: #{tpu_custom_call.1} parent=1 // pred_region
      _
    $region9: #{tpu_custom_call.1} parent=1 // pred_fallthru
      _
    // Predicated region
    $region10: #{tpu_custom_call.1} parent=1 // pred_check
      _
    $region11: #{tpu_custom_call.1} parent=1 // pred_check_branch
      %16 = sbr.rel (0) target = $region13
    $region12: #{tpu_custom_call.1} parent=1 // pred_region
      _
    $region13: #{tpu_custom_call.1} parent=1 // pred_fallthru
      _
    // Predicated region
    $region14: #{tpu_custom_call.1} parent=1 // pred_check
      _
    $region15: #{tpu_custom_call.1} parent=1 // pred_check_branch
      %18 = sbr.rel (0) target = $region17
    $region16: #{tpu_custom_call.1} parent=1 // pred_region
      _
    $region17: #{tpu_custom_call.1} parent=1 // pred_fallthru
      _
    // Predicated region
    $region18: #{tpu_custom_call.1} parent=1 // pred_check
      _
    $region19: #{tpu_custom_call.1} parent=1 // pred_check_branch
      %20 = sbr.rel (0) target = $region21
    $region20: #{tpu_custom_call.1} parent=1 // pred_region
      _
    $region21: #{tpu_custom_call.1} parent=1 // pred_fallthru
      _
    %v21 = vld [vmem:[%s0] sm:$0xff]
    %v22 = vld [vmem:[%s1] sm:$0xff]
    %v23 = vld [vmem:[%s1 + $0x8] sm:$0xff]
    %v24 = vld [vmem:[%s2] sm:$0x1]
    %v26 = vlaneseq
    %v27 = vshrl.u32 %v26, 7
    %v28 = vsub.s32 0, %v27
    %v29 = vrot.slane %v24, %v28
    %vm31 = vcmask 130048
    %v33 = vsel %vm31, %v21, 0
    %35 = vmatprep.subr.mxu0 0.0
    %36 = vmatpush1.msra.mxu0 %v22
    %37 = vmatprep.subr.mxu0 0.0
    %38 = vmatpush1.msra.mxu0 %v23
    %39 = vmatprep.subr.mxu0 0.0
    %40 = vmatpush1.msra.mxu0 0.0
    %41 = vmatprep.subr.mxu0 0.0
    %42 = vmatpush1.msra.mxu0 0.0
    %43 = vmatprep.subr.mxu0 0.0
    %44 = vmatpush1.msra.mxu0 0.0
    %45 = vmatprep.subr.mxu0 0.0
    %46 = vmatpush1.msra.mxu0 0.0
    %47 = vmatprep.subr.mxu0 0.0
    %48 = vmatpush1.msra.mxu0 0.0
    %49 = vmatprep.subr.mxu0 0.0
    %50 = vmatpush1.msra.mxu0 0.0
    %51 = vmatprep.subr.mxu0 0.0
    %52 = vmatpush1.msra.mxu0 0.0
    %53 = vmatprep.subr.mxu0 0.0
    %54 = vmatpush1.msra.mxu0 0.0
    %55 = vmatprep.subr.mxu0 0.0
    %56 = vmatpush1.msra.mxu0 0.0
    %57 = vmatprep.subr.mxu0 0.0
    %58 = vmatpush1.msra.mxu0 0.0
    %59 = vmatprep.subr.mxu0 0.0
    %60 = vmatpush1.msra.mxu0 0.0
    %61 = vmatprep.subr.mxu0 0.0
    %62 = vmatpush1.msra.mxu0 0.0
    %63 = vmatprep.subr.mxu0 0.0
    %64 = vmatpush1.msra.mxu0 0.0
    %65 = vmatprep.subr.mxu0 0.0
    %66 = vmatpush1.msra.mxu0 0.0
    %67 = vmatprep.subr.mxu0 0.0
    %68 = vmatpush1.msra.mxu0 0.0
    %69 = vmatprep.subr.mxu0 0.0
    %70 = vmatpush1.msra.mxu0 0.0
    %71 = vmatprep.subr.mxu0 0.0
    %72 = vmatpush1.msra.mxu0 0.0
    %73 = vmatprep.subr.mxu0 0.0
    %74 = vmatpush1.msra.mxu0 0.0
    %75 = vmatprep.subr.mxu0 0.0
    %76 = vmatpush1.msra.mxu0 0.0
    %77 = vmatprep.subr.mxu0 0.0
    %78 = vmatpush1.msra.mxu0 0.0
    %79 = vmatprep.subr.mxu0 0.0
    %80 = vmatpush1.msra.mxu0 0.0
    %81 = vmatprep.subr.mxu0 0.0
    %82 = vmatpush1.msra.mxu0 0.0
    %83 = vmatprep.subr.mxu0 0.0
    %84 = vmatpush1.msra.mxu0 0.0
    %85 = vmatprep.subr.mxu0 0.0
    %86 = vmatpush1.msra.mxu0 0.0
    %87 = vmatprep.subr.mxu0 0.0
    %88 = vmatpush1.msra.mxu0 0.0
    %89 = vmatprep.subr.mxu0 0.0
    %90 = vmatpush1.msra.mxu0 0.0
    %91 = vmatprep.subr.mxu0 0.0
    %92 = vmatpush1.msra.mxu0 0.0
    %93 = vmatprep.subr.mxu0 0.0
    %94 = vmatpush1.msra.mxu0 0.0
    %95 = vmatprep.subr.mxu0 0.0
    %96 = vmatpush1.msra.mxu0 0.0
    %97 = vmatprep.subr.mxu0 0.0
    %98 = vmatpush1.msra.mxu0 0.0
    %99 = vmatprep.mubr.f32.mxu0 0.0
    %100 = vmatmul.mubr.f32.gmra.mrb[0].mxu0 %v33
    %v101 = vpop.f32.mrb[0].mxu0
    %v102 = vadd.f32 %v29, %v101
    %v103 = vpop.f32.mrb[0].mxu0
    %104 = vdwg.mxu0
    %vm105 = vcmp.gt.f32.partialorder %v102, 0.0
    %v106 = vmul.f32 %v102, 0.1
    %v107 = vsel %vm105, %v102, %v106
    %v108 = vld [vmem:[%s3] sm:$0xff]
    %v109 = vld [vmem:[%s3 + $0x8] sm:$0xff]
    %v110 = vld [vmem:[%s3 + $0x10] sm:$0xff]
    %v111 = vld [vmem:[%s3 + $0x18] sm:$0xff]
    %v112 = vld [vmem:[%s3 + $0x20] sm:$0xff]
    %v113 = vld [vmem:[%s3 + $0x28] sm:$0xff]
    %v114 = vld [vmem:[%s3 + $0x30] sm:$0xff]
    %v115 = vld [vmem:[%s3 + $0x38] sm:$0xff]
    %v116 = vld [vmem:[%s3 + $0x40] sm:$0xff]
    %v117 = vld [vmem:[%s3 + $0x48] sm:$0xff]
    %v118 = vld [vmem:[%s3 + $0x50] sm:$0xff]
    %v119 = vld [vmem:[%s3 + $0x58] sm:$0xff]
    %v120 = vld [vmem:[%s3 + $0x60] sm:$0xff]
    %v121 = vld [vmem:[%s3 + $0x68] sm:$0xff]
    %v122 = vld [vmem:[%s3 + $0x70] sm:$0xff]
    %v123 = vld [vmem:[%s3 + $0x78] sm:$0xff]
    %v124 = vld [vmem:[%s4] sm:$0x1]
    %v126 = vlaneseq
    %v127 = vshrl.u32 %v126, 7
    %v128 = vsub.s32 0, %v127
    %v129 = vrot.slane %v124, %v128
    %131 = vmatprep.subr.mxu0 0.0
    %132 = vmatpush1.msra.mxu0 %v108
    %133 = vmatprep.subr.mxu0 0.0
    %134 = vmatpush1.msra.mxu0 %v109
    %135 = vmatprep.subr.mxu0 0.0
    %136 = vmatpush1.msra.mxu0 %v110
    %137 = vmatprep.subr.mxu0 0.0
    %138 = vmatpush1.msra.mxu0 %v111
    %139 = vmatprep.subr.mxu0 0.0
    %140 = vmatpush1.msra.mxu0 %v112
    %141 = vmatprep.subr.mxu0 0.0
    %142 = vmatpush1.msra.mxu0 %v113
    %143 = vmatprep.subr.mxu0 0.0
    %144 = vmatpush1.msra.mxu0 %v114
    %145 = vmatprep.subr.mxu0 0.0
    %146 = vmatpush1.msra.mxu0 %v115
    %147 = vmatprep.subr.mxu0 0.0
    %148 = vmatpush1.msra.mxu0 %v116
    %149 = vmatprep.subr.mxu0 0.0
    %150 = vmatpush1.msra.mxu0 %v117
    %151 = vmatprep.subr.mxu0 0.0
    %152 = vmatpush1.msra.mxu0 %v118
    %153 = vmatprep.subr.mxu0 0.0
    %154 = vmatpush1.msra.mxu0 %v119
    %155 = vmatprep.subr.mxu0 0.0
    %156 = vmatpush1.msra.mxu0 %v120
    %157 = vmatprep.subr.mxu0 0.0
    %158 = vmatpush1.msra.mxu0 %v121
    %159 = vmatprep.subr.mxu0 0.0
    %160 = vmatpush1.msra.mxu0 %v122
    %161 = vmatprep.subr.mxu0 0.0
    %162 = vmatpush1.msra.mxu0 %v123
    %163 = vmatprep.subr.mxu0 0.0
    %164 = vmatpush1.msra.mxu0 0.0
    %165 = vmatprep.subr.mxu0 0.0
    %166 = vmatpush1.msra.mxu0 0.0
    %167 = vmatprep.subr.mxu0 0.0
    %168 = vmatpush1.msra.mxu0 0.0
    %169 = vmatprep.subr.mxu0 0.0
    %170 = vmatpush1.msra.mxu0 0.0
    %171 = vmatprep.subr.mxu0 0.0
    %172 = vmatpush1.msra.mxu0 0.0
    %173 = vmatprep.subr.mxu0 0.0
    %174 = vmatpush1.msra.mxu0 0.0
    %175 = vmatprep.subr.mxu0 0.0
    %176 = vmatpush1.msra.mxu0 0.0
    %177 = vmatprep.subr.mxu0 0.0
    %178 = vmatpush1.msra.mxu0 0.0
    %179 = vmatprep.subr.mxu0 0.0
    %180 = vmatpush1.msra.mxu0 0.0
    %181 = vmatprep.subr.mxu0 0.0
    %182 = vmatpush1.msra.mxu0 0.0
    %183 = vmatprep.subr.mxu0 0.0
    %184 = vmatpush1.msra.mxu0 0.0
    %185 = vmatprep.subr.mxu0 0.0
    %186 = vmatpush1.msra.mxu0 0.0
    %187 = vmatprep.subr.mxu0 0.0
    %188 = vmatpush1.msra.mxu0 0.0
    %189 = vmatprep.subr.mxu0 0.0
    %190 = vmatpush1.msra.mxu0 0.0
    %191 = vmatprep.subr.mxu0 0.0
    %192 = vmatpush1.msra.mxu0 0.0
    %193 = vmatprep.subr.mxu0 0.0
    %194 = vmatpush1.msra.mxu0 0.0
    %195 = vmatprep.mubr.f32.mxu0 0.0
    %196 = vmatmul.mubr.f32.gmra.mrb[0].mxu0 %v107
    %v197 = vpop.f32.mrb[0].mxu0
    %v198 = vadd.f32 %v129, %v197
    %v199 = vpop.f32.mrb[0].mxu0
    %200 = vdwg.mxu0
    %v201 = vxor.u32 %v198, 2147483648
    %v202 = vmul.f32 %v201, 1.442695
    %v203 = vpow.pop %v202
    %v204 = vadd.f32 %v203, 1.0
    %v205 = vrcp.pop %v204
    %v206 = vmul.f32 1.0, %v205
    %v207 = vmul.f32 %v206, 6.2831855
    %vm208 = vcmask 64512
    %209 = vst.msk [vmem:[#allocation2] sm:$0xff] %vm208, %v207
    // Predicated region
    $region22: #{tpu_custom_call.1} parent=1 // pred_check
      _
    $region23: #{tpu_custom_call.1} parent=1 // pred_check_branch
      %211 = sbr.rel (0) target = $region25
    $region24: #{tpu_custom_call.1} parent=1 // pred_region
      %s213 = ssub.s32 128, 128
      %214 = vsyncadd [#allocation3], %s213
      %s216 = sshll.u32 [#allocation2], 4
      %s217 = int_to_ptr.vmem [resolvable:$true] %s216
      %219 = dma.vmem_to_hbm [thread:$0]  %s217, 128, %s5, [#allocation3]
    $region25: #{tpu_custom_call.1} parent=1 // pred_fallthru
      _
    // Predicated region
    $region26: #{tpu_custom_call.1} parent=1 // pred_check
      _
    $region27: #{tpu_custom_call.1} parent=1 // pred_check_branch
      %221 = sbr.rel (0) target = $region29
    $region28: #{tpu_custom_call.1} parent=1 // pred_region
      %222 = dma.done [#allocation3], 128
    $region29: #{tpu_custom_call.1} parent=1 // pred_fallthru
      _
    %223 = vsyncpa [#allocation3], 1

</llo_original>
